<compile_context>
chip_gen: v7x
topology: tpu7x:2x2x1
jax: 0.10.0
libtpu: 0.0.40
codegen_flags: <defaults>
</compile_context>

<pallas_src>
import math
import functools

import jax
import jax.numpy as jnp
from jax.experimental import pallas as pl
from jax.experimental.pallas import tpu as pltpu


_MAX_TB = 4096   # rows per grid step; 2048-8192 all reasonable, sweep if needed
_MIN_TB = 1024   # below this the ~0.35us per-step pipeline overhead dominates


def _round_up(x, m):
    return ((x + m - 1) // m) * m


def _evaluate_kernel(state_ref, action_ref,
                     w1_ref, b1_ref, w2_ref, b2c_ref,
                     out_ref, *, action_dim):
    x = state_ref[...]                                   # (TB, S) f32
    act = action_ref[...]                                # (TB, A) f32

    # ---- fused layer 1: actor|critic side-by-side, one bf16 MXU push ------
    h = jnp.tanh(
        jnp.dot(x.astype(jnp.bfloat16), w1_ref[...],
                preferred_element_type=jnp.float32) + b1_ref[...])   # (TB, 2H) f32

    # ---- fused layer 2: block-diagonal weight, one bf16 MXU push ----------
    #   y[:, :A]    = pre-tanh action mean  (h_a @ AW2 + ab2)
    #   y[:, A:A+1] = state value           (h_v @ VW2 + vb2)
    consts = b2c_ref[...]                                # (2, A+1) f32
    b2 = consts[0:1, :]
    y = jnp.dot(h.astype(jnp.bfloat16), w2_ref[...],
                preferred_element_type=jnp.float32) + b2              # (TB, A+1)

    action_mean = jnp.tanh(y[:, :action_dim])            # (TB, A)
    value = y[:, action_dim:action_dim + 1]              # (TB, 1)

    # ---- diagonal-MVN log_prob (param-only constants precomputed on host) --
    crow = consts[1:2, :]                                # (1, A+1)
    neg_half_inv_var = crow[:, :action_dim]              # (1, A)  = -0.5 / var
    logp_const = crow[:, action_dim:action_dim + 1]      # (1, 1)

    diff = act - action_mean
    logp = jnp.sum(diff * diff * neg_half_inv_var,
                   axis=-1, keepdims=True) + logp_const  # (TB, 1)

    # single lane-merged store: [log_prob | value]
    out_ref[...] = jnp.concatenate([logp, value], axis=-1)


def cont_actor_critic_evaluate(state, action, packed):
    """Returns (action_logprobs (B,), state_value (B,), dist_entropy (B,))."""
    B, S = state.shape
    A = action.shape[1]
    H2 = packed["w1"].shape[1]                            # 2 * hidden

    # Only sublane padding (<8 rows), never a full copy to a TB multiple.
    B_pad = _round_up(B, 8)
    if B_pad != B:
        state = jnp.pad(state, ((0, B_pad - B), (0, 0)))
        action = jnp.pad(action, ((0, B_pad - B), (0, 0)))

    # Batch tile: big enough to amortize per-step pipeline overhead, small
    # enough to keep >=4 grid steps when possible (dual-TC sharding on v7x)
    # and to stay inside the per-generation VMEM budget.
    if B_pad <= _MIN_TB:
        TB = B_pad
    else:
        TB = max(_MIN_TB, min(_MAX_TB, _round_up(pl.cdiv(B_pad, 4), 8)))
    grid = pl.cdiv(B_pad, TB)   # boundary block rows are garbage, sliced off

    kern = functools.partial(_evaluate_kernel, action_dim=A)

    out = pl.pallas_call(
        kern,
        out_shape=jax.ShapeDtypeStruct((B_pad, 2), jnp.float32),
        grid=(grid,),
        in_specs=[
            pl.BlockSpec((TB, S), lambda i: (i, 0)),       # state (streamed)
            pl.BlockSpec((TB, A), lambda i: (i, 0)),       # action (streamed)
            pl.BlockSpec((S, H2), lambda i: (0, 0)),       # fused W1 (bf16, resident)
            pl.BlockSpec((1, H2), lambda i: (0, 0)),       # fused b1 (f32)
            pl.BlockSpec((H2, A + 1), lambda i: (0, 0)),   # block-diag W2 (bf16)
            pl.BlockSpec((2, A + 1), lambda i: (0, 0)),    # [b2 ; -0.5/var|logp const]
        ],
        out_specs=pl.BlockSpec((TB, 2), lambda i: (i, 0)),
        compiler_params=pltpu.CompilerParams(
            dimension_semantics=("parallel",),
            vmem_limit_bytes=48 * 1024 * 1024),
    )(state, action, packed["w1"], packed["b1"], packed["w2"], packed["b2c"])

    logp = out[:B, 0]
    value = out[:B, 1]
    ent = jnp.broadcast_to(packed["entropy"], (B,))        # policy-constant
    return logp, value, ent


def init_params(key, state_dim, hidden_dim, action_dim, action_std):
    """Deterministic synthetic params in the PyTorch-like (unpacked) layout."""
    ks = jax.random.split(key, 4)

    def lin(k, fan_in, fan_out):
        bound = 1.0 / math.sqrt(fan_in)
        kw, kb = jax.random.split(k)
        w = jax.random.uniform(kw, (fan_in, fan_out), jnp.float32, -bound, bound)
        b = jax.random.uniform(kb, (1, fan_out), jnp.float32, -bound, bound)
        return w, b

    aw1, ab1 = lin(ks[0], state_dim, hidden_dim)
    aw2, ab2 = lin(ks[1], hidden_dim, action_dim)
    vw1, vb1 = lin(ks[2], state_dim, hidden_dim)
    vw2, vb2 = lin(ks[3], hidden_dim, 1)
    return dict(
        aw1=aw1, ab1=ab1, aw2=aw2, ab2=ab2,
        vw1=vw1, vb1=vb1, vw2=vw2, vb2=vb2,
        action_var=jnp.full((1, action_dim), action_std * action_std, jnp.float32),
    )


def pack_params(p):
    """One-time packing: fuse actor/critic weights (bf16) and hoist param math."""
    aw1, ab1, aw2, ab2 = p["aw1"], p["ab1"], p["aw2"], p["ab2"]
    vw1, vb1, vw2, vb2 = p["vw1"], p["vb1"], p["vw2"], p["vb2"]
    var = p["action_var"]                                  # (1, A)
    S, H = aw1.shape
    A = aw2.shape[1]

    w1 = jnp.concatenate([aw1, vw1], axis=1).astype(jnp.bfloat16)   # (S, 2H)
    b1 = jnp.concatenate([ab1, vb1], axis=1)                        # (1, 2H) f32

    w2f = jnp.zeros((2 * H, A + 1), jnp.float32)            # block-diagonal
    w2f = w2f.at[:H, :A].set(aw2)
    w2f = w2f.at[H:, A:].set(vw2)
    w2 = w2f.astype(jnp.bfloat16)                            # (2H, A+1)
    b2 = jnp.concatenate([ab2, vb2], axis=1)                 # (1, A+1) f32

    log_2pi = math.log(2.0 * math.pi)
    sum_log_var = jnp.sum(jnp.log(var))
    logp_const = -0.5 * (A * log_2pi + sum_log_var)          # scalar
    crow = jnp.concatenate(
        [-0.5 / var, jnp.reshape(logp_const, (1, 1))], axis=1)   # (1, A+1)
    b2c = jnp.concatenate([b2, crow], axis=0)                # (2, A+1) f32

    entropy = 0.5 * A * (1.0 + log_2pi) + 0.5 * sum_log_var  # scalar

    return dict(w1=w1, b1=b1, w2=w2, b2c=b2c,
                entropy=jnp.asarray(entropy, jnp.float32))


def _reference(state, action, p):
    """Pure-JAX f32 reference on the unpacked (PyTorch-layout) params."""
    h_a = jnp.tanh(state @ p["aw1"] + p["ab1"])
    mean = jnp.tanh(h_a @ p["aw2"] + p["ab2"])
    h_v = jnp.tanh(state @ p["vw1"] + p["vb1"])
    value = (h_v @ p["vw2"] + p["vb2"])[:, 0]
    var = p["action_var"]
    d = var.shape[-1]
    logp = (-0.5 * jnp.sum((action - mean) ** 2 / var, axis=-1)
            - 0.5 * (d * math.log(2 * math.pi) + jnp.sum(jnp.log(var))))
    ent = 0.5 * d * (1 + math.log(2 * math.pi)) + 0.5 * jnp.sum(jnp.log(var))
    return logp, value, jnp.broadcast_to(ent, logp.shape)


def _reference_packed(state, action, packed, action_dim):
    """Pure-JAX reference that mirrors the kernel's bf16/f32 mixed precision."""
    h = jnp.tanh(jnp.dot(state.astype(jnp.bfloat16), packed["w1"],
                         preferred_element_type=jnp.float32) + packed["b1"])
    y = jnp.dot(h.astype(jnp.bfloat16), packed["w2"],
                preferred_element_type=jnp.float32) + packed["b2c"][0:1, :]
    mean = jnp.tanh(y[:, :action_dim])
    value = y[:, action_dim]
    crow = packed["b2c"][1:2, :]
    diff = action - mean
    logp = (jnp.sum(diff * diff * crow[:, :action_dim], axis=-1)
            + crow[0, action_dim])
    return logp, value


if __name__ == "__main__":
    B, STATE_DIM, HIDDEN, ACTION_DIM = 8, 16, 32, 4
    ACTION_STD = 0.5

    key = jax.random.PRNGKey(0)
    k_p, k_s, k_a = jax.random.split(key, 3)
    params = init_params(k_p, STATE_DIM, HIDDEN, ACTION_DIM, ACTION_STD)
    packed = pack_params(params)

    # --- small-shape correctness run -------------------------------------
    state = jax.random.normal(k_s, (B, STATE_DIM), jnp.float32)
    action = jax.random.normal(k_a, (B, ACTION_DIM), jnp.float32)

    logp, value, ent = cont_actor_critic_evaluate(state, action, packed)
    jax.block_until_ready((logp, value, ent))

    # Tight check vs a JAX reference using the same bf16 packed weights.
    e_logp, e_value = _reference_packed(state, action, packed, ACTION_DIM)
    assert jnp.allclose(logp, e_logp, atol=1e-3), "log_prob mismatch (packed ref)"
    assert jnp.allclose(value, e_value, atol=1e-3), "value mismatch (packed ref)"

    # Semantic check vs the f32 unpacked reference (bf16 MXU -> looser tol).
    r_logp, r_value, r_ent = _reference(state, action, params)
    assert jnp.allclose(logp, r_logp, atol=2.5e-1, rtol=5e-2), "log_prob mismatch"
    assert jnp.allclose(value, r_value, atol=5e-2), "value mismatch"
    assert jnp.allclose(ent, r_ent, atol=1e-5), "entropy mismatch"

    # --- multi-step grid / boundary-block smoke test ----------------------
    BL = 5000   # > _MAX_TB -> 4 grid steps with a non-divisible boundary block
    k_s2, k_a2 = jax.random.split(jax.random.PRNGKey(1))
    state_l = jax.random.normal(k_s2, (BL, STATE_DIM), jnp.float32)
    action_l = jax.random.normal(k_a2, (BL, ACTION_DIM), jnp.float32)
    logp_l, value_l, _ = cont_actor_critic_evaluate(state_l, action_l, packed)
    jax.block_until_ready((logp_l, value_l))
    el_logp, el_value = _reference_packed(state_l, action_l, packed, ACTION_DIM)
    assert jnp.allclose(logp_l, el_logp, atol=1e-3), "large-batch log_prob mismatch"
    assert jnp.allclose(value_l, el_value, atol=1e-3), "large-batch value mismatch"

    print("KERNEL_OK")
</pallas_src>

<mosaic_0001>
module attributes {stable_mosaic.version = 11 : i64} {
  func.func @_evaluate_kernel(%arg0: i32, %arg1: memref<8x16xf32, #tpu.memory_space<vmem>>, %arg2: memref<8x4xf32, #tpu.memory_space<vmem>>, %arg3: memref<16x64xbf16, #tpu.memory_space<vmem>>, %arg4: memref<1x64xf32, #tpu.memory_space<vmem>>, %arg5: memref<64x5xbf16, #tpu.memory_space<vmem>>, %arg6: memref<2x5xf32, #tpu.memory_space<vmem>>, %arg7: memref<8x2xf32, #tpu.memory_space<vmem>>) attributes {dimension_semantics = [#tpu.dimension_semantics<parallel>], iteration_bounds = array<i64: 1>, scalar_prefetch = 0 : i64, scratch_operands = 0 : i64, tpu.core_type = #tpu.core_type<tc>, window_params = [{transform_indices = @transform_0, window_bounds = array<i64: 8, 16>}, {transform_indices = @transform_1, window_bounds = array<i64: 8, 4>}, {pipeline_mode = #tpu.pipeline_mode<synchronous>, transform_indices = @transform_2, window_bounds = array<i64: 16, 64>}, {pipeline_mode = #tpu.pipeline_mode<synchronous>, transform_indices = @transform_3, window_bounds = array<i64: 1, 64>}, {pipeline_mode = #tpu.pipeline_mode<synchronous>, transform_indices = @transform_4, window_bounds = array<i64: 64, 5>}, {pipeline_mode = #tpu.pipeline_mode<synchronous>, transform_indices = @transform_5, window_bounds = array<i64: 2, 5>}, {transform_indices = @transform_6, window_bounds = array<i64: 8, 2>}]} {
    %c0 = arith.constant 0 : index
    %c0_0 = arith.constant 0 : index
    %0 = vector.load %arg1[%c0, %c0_0] : memref<8x16xf32, #tpu.memory_space<vmem>>, vector<8x16xf32>
    %c0_1 = arith.constant 0 : index
    %c0_2 = arith.constant 0 : index
    %1 = vector.load %arg2[%c0_1, %c0_2] : memref<8x4xf32, #tpu.memory_space<vmem>>, vector<8x4xf32>
    %2 = arith.truncf %0 : vector<8x16xf32> to vector<8x16xbf16>
    %c0_3 = arith.constant 0 : index
    %c0_4 = arith.constant 0 : index
    %3 = vector.load %arg3[%c0_3, %c0_4] : memref<16x64xbf16, #tpu.memory_space<vmem>>, vector<16x64xbf16>
    %cst = arith.constant dense<0.000000e+00> : vector<8x64xf32>
    %4 = tpu.matmul %2, %3, %cst {dimension_numbers = #tpu.dot_dimension_numbers<[1], [0], [0], [1], [0, 0, 1, 1], [], []>} : vector<8x16xbf16>, vector<16x64xbf16>, vector<8x64xf32> -> vector<8x64xf32>
    %c0_5 = arith.constant 0 : index
    %c0_6 = arith.constant 0 : index
    %5 = vector.load %arg4[%c0_5, %c0_6] : memref<1x64xf32, #tpu.memory_space<vmem>>, vector<1x64xf32>
    %6 = vector.broadcast %5 : vector<1x64xf32> to vector<8x64xf32>
    %7 = arith.addf %4, %6 : vector<8x64xf32>
    %8 = math.tanh %7 : vector<8x64xf32>
    %c0_7 = arith.constant 0 : index
    %c0_8 = arith.constant 0 : index
    %9 = vector.load %arg6[%c0_7, %c0_8] : memref<2x5xf32, #tpu.memory_space<vmem>>, vector<2x5xf32>
    %10 = vector.extract_strided_slice %9 {offsets = [0, 0], sizes = [1, 5], strides = [1, 1]} : vector<2x5xf32> to vector<1x5xf32>
    %11 = arith.truncf %8 : vector<8x64xf32> to vector<8x64xbf16>
    %c0_9 = arith.constant 0 : index
    %c0_10 = arith.constant 0 : index
    %12 = vector.load %arg5[%c0_9, %c0_10] : memref<64x5xbf16, #tpu.memory_space<vmem>>, vector<64x5xbf16>
    %cst_11 = arith.constant dense<0.000000e+00> : vector<8x5xf32>
    %13 = tpu.matmul %11, %12, %cst_11 {dimension_numbers = #tpu.dot_dimension_numbers<[1], [0], [0], [1], [0, 0, 1, 1], [], []>} : vector<8x64xbf16>, vector<64x5xbf16>, vector<8x5xf32> -> vector<8x5xf32>
    %14 = vector.broadcast %10 : vector<1x5xf32> to vector<8x5xf32>
    %15 = arith.addf %13, %14 : vector<8x5xf32>
    %16 = vector.extract_strided_slice %15 {offsets = [0, 0], sizes = [8, 4], strides = [1, 1]} : vector<8x5xf32> to vector<8x4xf32>
    %17 = math.tanh %16 : vector<8x4xf32>
    %18 = vector.extract_strided_slice %15 {offsets = [0, 4], sizes = [8, 1], strides = [1, 1]} : vector<8x5xf32> to vector<8x1xf32>
    %19 = vector.extract_strided_slice %9 {offsets = [1, 0], sizes = [1, 5], strides = [1, 1]} : vector<2x5xf32> to vector<1x5xf32>
    %20 = vector.extract_strided_slice %19 {offsets = [0, 0], sizes = [1, 4], strides = [1, 1]} : vector<1x5xf32> to vector<1x4xf32>
    %21 = vector.extract_strided_slice %19 {offsets = [0, 4], sizes = [1, 1], strides = [1, 1]} : vector<1x5xf32> to vector<1x1xf32>
    %22 = arith.subf %1, %17 : vector<8x4xf32>
    %23 = arith.mulf %22, %22 : vector<8x4xf32>
    %24 = vector.broadcast %20 : vector<1x4xf32> to vector<8x4xf32>
    %25 = arith.mulf %23, %24 : vector<8x4xf32>
    %cst_12 = arith.constant dense<0.000000e+00> : vector<8xf32>
    %26 = vector.multi_reduction <add>, %25, %cst_12 [1] : vector<8x4xf32> to vector<8xf32>
    %27 = vector.shape_cast %26 : vector<8xf32> to vector<8x1xf32>
    %28 = vector.broadcast %21 : vector<1x1xf32> to vector<8x1xf32>
    %29 = arith.addf %27, %28 : vector<8x1xf32>
    %30 = tpu.concatenate %29, %18 in 1 : vector<8x1xf32>, vector<8x1xf32> -> vector<8x2xf32>
    %c0_13 = arith.constant 0 : index
    %c0_14 = arith.constant 0 : index
    %31 = vector.load %arg7[%c0_13, %c0_14] : memref<8x2xf32, #tpu.memory_space<vmem>>, vector<8x2xf32>
    tpu.vector_store %arg7[%c0_13, %c0_14], %30 {strides = array<i32>} : memref<8x2xf32, #tpu.memory_space<vmem>>, vector<8x2xf32>,
    return
  }
  func.func @transform_0(%arg0: i32) -> (i32, i32) {
    %c0_i32 = arith.constant 0 : i32
    %c0_i32_0 = arith.constant 0 : i32
    return %arg0, %c0_i32 : i32, i32
  }
  func.func @transform_1(%arg0: i32) -> (i32, i32) {
    %c0_i32 = arith.constant 0 : i32
    %c0_i32_0 = arith.constant 0 : i32
    return %arg0, %c0_i32 : i32, i32
  }
  func.func @transform_2(%arg0: i32) -> (i32, i32) {
    %c0_i32 = arith.constant 0 : i32
    %c0_i32_0 = arith.constant 0 : i32
    %c0_i32_1 = arith.constant 0 : i32
    return %c0_i32, %c0_i32_0 : i32, i32
  }
  func.func @transform_3(%arg0: i32) -> (i32, i32) {
    %c0_i32 = arith.constant 0 : i32
    %c0_i32_0 = arith.constant 0 : i32
    %c0_i32_1 = arith.constant 0 : i32
    return %c0_i32, %c0_i32_0 : i32, i32
  }
  func.func @transform_4(%arg0: i32) -> (i32, i32) {
    %c0_i32 = arith.constant 0 : i32
    %c0_i32_0 = arith.constant 0 : i32
    %c0_i32_1 = arith.constant 0 : i32
    return %c0_i32, %c0_i32_0 : i32, i32
  }
  func.func @transform_5(%arg0: i32) -> (i32, i32) {
    %c0_i32 = arith.constant 0 : i32
    %c0_i32_0 = arith.constant 0 : i32
    %c0_i32_1 = arith.constant 0 : i32
    return %c0_i32, %c0_i32_0 : i32, i32
  }
  func.func @transform_6(%arg0: i32) -> (i32, i32) {
    %c0_i32 = arith.constant 0 : i32
    %c0_i32_0 = arith.constant 0 : i32
    return %arg0, %c0_i32 : i32, i32
  }
}

</mosaic_0001>

<llo_original>
// kernel: tpu_custom_call.1
$region0: #{tpu_custom_call.1}
  #allocation0 [shape = 'u32[]', space=smem, size = 0x4, offset = 0x4, fixed_abs, tag = 'smem constant byte address 0x4 - core index']
  #allocation1 [shape = 'u32[144,128]{1,0:T(1,128)}', space=vmem, size = 0x12000, scoped, tag = 'internal scratch']
  %s0 = inlined_call_operand.vmem [shape: f32[8,16], index: 0, kind: input, shape index: {}]
  %s1 = inlined_call_operand.vmem [shape: f32[8,4], index: 1, kind: input, shape index: {}]
  %s2 = inlined_call_operand.vmem [shape: bf16[16,64], index: 2, kind: input, shape index: {}]
  %s3 = inlined_call_operand.vmem [shape: f32[1,64], index: 3, kind: input, shape index: {}]
  %s4 = inlined_call_operand.vmem [shape: bf16[64,5], index: 4, kind: input, shape index: {}]
  %s5 = inlined_call_operand.vmem [shape: f32[2,5], index: 5, kind: input, shape index: {}]
  %s6 = inlined_call_operand.vmem [shape: f32[8,2], index: 6, kind: output, shape index: {}]
  %s7 = sld [smem:[#allocation0]]
  $region34: #{tpu_custom_call.1} parent=0
    _
  %s9 = ssub.s32 1, %s7
  %s10 = scalar_select 0, %s9, %s7
  // Predicated region
  $region2: #{tpu_custom_call.1} parent=0 // pred_check
    _
  $region3: #{tpu_custom_call.1} parent=0 // pred_check_branch
    %12 = sbr.rel (0) target = $region5
  $region4: #{tpu_custom_call.1} parent=0 // pred_region
    _
  $region5: #{tpu_custom_call.1} parent=0 // pred_fallthru
    _
  // Predicated region
  $region6: #{tpu_custom_call.1} parent=0 // pred_check
    _
  $region7: #{tpu_custom_call.1} parent=0 // pred_check_branch
    %14 = sbr.rel (0) target = $region9
  $region8: #{tpu_custom_call.1} parent=0 // pred_region
    _
  $region9: #{tpu_custom_call.1} parent=0 // pred_fallthru
    _
  // Predicated region
  $region10: #{tpu_custom_call.1} parent=0 // pred_check
    _
  $region11: #{tpu_custom_call.1} parent=0 // pred_check_branch
    %16 = sbr.rel (0) target = $region13
  $region12: #{tpu_custom_call.1} parent=0 // pred_region
    _
  $region13: #{tpu_custom_call.1} parent=0 // pred_fallthru
    _
  // Predicated region
  $region14: #{tpu_custom_call.1} parent=0 // pred_check
    _
  $region15: #{tpu_custom_call.1} parent=0 // pred_check_branch
    %18 = sbr.rel (0) target = $region17
  $region16: #{tpu_custom_call.1} parent=0 // pred_region
    _
  $region17: #{tpu_custom_call.1} parent=0 // pred_fallthru
    _
  // Predicated region
  $region18: #{tpu_custom_call.1} parent=0 // pred_check
    _
  $region19: #{tpu_custom_call.1} parent=0 // pred_check_branch
    %20 = sbr.rel (0) target = $region21
  $region20: #{tpu_custom_call.1} parent=0 // pred_region
    _
  $region21: #{tpu_custom_call.1} parent=0 // pred_fallthru
    _
  // Predicated region
  $region22: #{tpu_custom_call.1} parent=0 // pred_check
    _
  $region23: #{tpu_custom_call.1} parent=0 // pred_check_branch
    %22 = sbr.rel (0) target = $region25
  $region24: #{tpu_custom_call.1} parent=0 // pred_region
    _
  $region25: #{tpu_custom_call.1} parent=0 // pred_fallthru
    _
  %v24 = vld [vmem:[%s0] sm:$0xff]
  %v25 = vld [vmem:[%s1] sm:$0xff]
  %v26 = vpack.c.bf16 %v24, %v24
  %v27 = vld [vmem:[%s2] sm:$0xf]
  %v28 = vld [vmem:[%s2 + $0x4] sm:$0xf]
  %v29 = vld [vmem:[%s3] sm:$0x1]
  %v31 = vlaneseq
  %v32 = vshrl.u32 %v31, 7
  %v33 = vsub.s32 0, %v32
  %v34 = vrot.slane %v29, %v33
  %v38 = vunpack.c.l.b16 %v27
  %v39 = vunpack.c.l.b16 %v28
  %v40 = vpack.c.b16 %v39, %v38
  %vm42 = vcmask 130048
  %v44 = vsel %vm42, %v26, 0
  %46 = vmatprep.subr.bf16.mxu0 0
  %47 = vmatpush1.bf16.msra.mxu0 %v40
  %48 = vmatprep.subr.bf16.mxu0 0
  %49 = vmatpush1.bf16.msra.mxu0 0
  %50 = vmatprep.subr.bf16.mxu0 0
  %51 = vmatpush1.bf16.msra.mxu0 0
  %52 = vmatprep.subr.bf16.mxu0 0
  %53 = vmatpush1.bf16.msra.mxu0 0
  %54 = vmatprep.subr.bf16.mxu0 0
  %55 = vmatpush1.bf16.msra.mxu0 0
  %56 = vmatprep.subr.bf16.mxu0 0
  %57 = vmatpush1.bf16.msra.mxu0 0
  %58 = vmatprep.subr.bf16.mxu0 0
  %59 = vmatpush1.bf16.msra.mxu0 0
  %60 = vmatprep.subr.bf16.mxu0 0
  %61 = vmatpush1.bf16.msra.mxu0 0
  %62 = vmatprep.subr.bf16.mxu0 0
  %63 = vmatpush1.bf16.msra.mxu0 0
  %64 = vmatprep.subr.bf16.mxu0 0
  %65 = vmatpush1.bf16.msra.mxu0 0
  %66 = vmatprep.subr.bf16.mxu0 0
  %67 = vmatpush1.bf16.msra.mxu0 0
  %68 = vmatprep.subr.bf16.mxu0 0
  %69 = vmatpush1.bf16.msra.mxu0 0
  %70 = vmatprep.subr.bf16.mxu0 0
  %71 = vmatpush1.bf16.msra.mxu0 0
  %72 = vmatprep.subr.bf16.mxu0 0
  %73 = vmatpush1.bf16.msra.mxu0 0
  %74 = vmatprep.subr.bf16.mxu0 0
  %75 = vmatpush1.bf16.msra.mxu0 0
  %76 = vmatprep.subr.bf16.mxu0 0
  %77 = vmatpush1.bf16.msra.mxu0 0
  %78 = vmatprep.mubr.bf16.mxu0 0
  %79 = vmatmul.mubr.bf16.gmra.mrb[0].mxu0 %v44
  %v80 = vpop.f32.mrb[0].mxu0
  %v81 = vadd.f32 %v34, %v80
  %v82 = vpop.f32.mrb[0].mxu0
  %v83 = vpop.f32.mrb[0].mxu0
  %v84 = vpop.f32.mrb[0].mxu0
  %85 = vdwg.mxu0
  %v86 = vtanh.pop %v81
  %v87 = vld [vmem:[%s5] sm:$0x3]
  %v88 = vpack.c.bf16 %v86, %v86
  %v89 = vld [vmem:[%s4] sm:$0xf]
  %v90 = vld [vmem:[%s4 + $0x4] sm:$0xf]
  %v91 = vld [vmem:[%s4 + $0x8] sm:$0xf]
  %v92 = vld [vmem:[%s4 + $0xc] sm:$0xf]
  %v93 = vld [vmem:[%s4 + $0x10] sm:$0xf]
  %v94 = vld [vmem:[%s4 + $0x14] sm:$0xf]
  %v95 = vld [vmem:[%s4 + $0x18] sm:$0xf]
  %v96 = vld [vmem:[%s4 + $0x1c] sm:$0xf]
  %v97 = vlaneseq
  %v98 = vshrl.u32 %v97, 7
  %v99 = vsub.s32 0, %v98
  %v100 = vrot.slane %v87, %v99
  %v109 = vunpack.c.l.b16 %v89
  %v110 = vunpack.c.l.b16 %v90
  %v111 = vunpack.c.l.b16 %v91
  %v112 = vunpack.c.l.b16 %v92
  %v113 = vunpack.c.l.b16 %v93
  %v114 = vunpack.c.l.b16 %v94
  %v115 = vunpack.c.l.b16 %v95
  %v116 = vunpack.c.l.b16 %v96
  %v117 = vpack.c.b16 %v110, %v109
  %v118 = vpack.c.b16 %v112, %v111
  %v119 = vpack.c.b16 %v114, %v113
  %v120 = vpack.c.b16 %v116, %v115
  %vm125 = vcmask 523264
  %v127 = vsel %vm125, %v88, 0
  %129 = vmatprep.subr.bf16.mxu0 0
  %130 = vmatpush1.bf16.msra.mxu0 %v117
  %131 = vmatprep.subr.bf16.mxu0 0
  %132 = vmatpush1.bf16.msra.mxu0 %v118
  %133 = vmatprep.subr.bf16.mxu0 0
  %134 = vmatpush1.bf16.msra.mxu0 %v119
  %135 = vmatprep.subr.bf16.mxu0 0
  %136 = vmatpush1.bf16.msra.mxu0 %v120
  %137 = vmatprep.subr.bf16.mxu0 0
  %138 = vmatpush1.bf16.msra.mxu0 0
  %139 = vmatprep.subr.bf16.mxu0 0
  %140 = vmatpush1.bf16.msra.mxu0 0
  %141 = vmatprep.subr.bf16.mxu0 0
  %142 = vmatpush1.bf16.msra.mxu0 0
  %143 = vmatprep.subr.bf16.mxu0 0
  %144 = vmatpush1.bf16.msra.mxu0 0
  %145 = vmatprep.subr.bf16.mxu0 0
  %146 = vmatpush1.bf16.msra.mxu0 0
  %147 = vmatprep.subr.bf16.mxu0 0
  %148 = vmatpush1.bf16.msra.mxu0 0
  %149 = vmatprep.subr.bf16.mxu0 0
  %150 = vmatpush1.bf16.msra.mxu0 0
  %151 = vmatprep.subr.bf16.mxu0 0
  %152 = vmatpush1.bf16.msra.mxu0 0
  %153 = vmatprep.subr.bf16.mxu0 0
  %154 = vmatpush1.bf16.msra.mxu0 0
  %155 = vmatprep.subr.bf16.mxu0 0
  %156 = vmatpush1.bf16.msra.mxu0 0
  %157 = vmatprep.subr.bf16.mxu0 0
  %158 = vmatpush1.bf16.msra.mxu0 0
  %159 = vmatprep.subr.bf16.mxu0 0
  %160 = vmatpush1.bf16.msra.mxu0 0
  %161 = vmatprep.mubr.bf16.mxu0 0
  %162 = vmatmul.mubr.bf16.gmra.mrb[0].mxu0 %v127
  %v163 = vpop.f32.mrb[0].mxu0
  %v164 = vadd.f32 %v100, %v163
  %v165 = vpop.f32.mrb[0].mxu0
  %v166 = vpop.f32.mrb[0].mxu0
  %v167 = vpop.f32.mrb[0].mxu0
  %168 = vdwg.mxu0
  %v169 = vtanh.pop %v164
  %v170 = vsub.f32 %v25, %v169
  %v171 = vmul.f32 %v170, %v170
  %v172 = vlaneseq
  %v173 = vshrl.u32 %v172, 7
  %v174 = vsub.s32 1, %v173
  %v175 = vrot.slane %v87, %v174
  %v176 = vmul.f32 %v171, %v175
  %vm177 = vcmask 31744
  %v178 = vsel %vm177, %v176, 0.0
  %179 = vadd.xlane.f32.xlu0 %v178
  %v180 = vpop.xlane.xlu0 %179
  %v181 = vadd.f32 %v180, %v175
  %183 = vrot.lane.b32.xlu0 %v181, 124
  %v184 = vpop.permute.xlu0 %183
  %187 = vrot.lane.b32.xlu0 %v164, 125
  %v188 = vpop.permute.xlu0 %187
  %vm190 = vcmask 7168
  %v191 = vsel %vm190, %v184, %v188
  %vm192 = vcmask 15360
  %193 = vst.msk [vmem:[%s6] sm:$0xff] %vm192, %v191
  // Predicated region
  $region26: #{tpu_custom_call.1} parent=0 // pred_check
    _
  $region27: #{tpu_custom_call.1} parent=0 // pred_check_branch
    %195 = sbr.rel (0) target = $region29
  $region28: #{tpu_custom_call.1} parent=0 // pred_region
    _
  $region29: #{tpu_custom_call.1} parent=0 // pred_fallthru
    _
  // Predicated region
  $region30: #{tpu_custom_call.1} parent=0 // pred_check
    _
  $region31: #{tpu_custom_call.1} parent=0 // pred_check_branch
    %197 = sbr.rel (0) target = $region33
  $region32: #{tpu_custom_call.1} parent=0 // pred_region
    _
  $region33: #{tpu_custom_call.1} parent=0 // pred_fallthru
    _

</llo_original>
